<compile_context>
chip_gen: v5e
topology: v5e:2x2
jax: 0.10.0
libtpu: 0.0.40
codegen_flags: <defaults>
</compile_context>

<pallas_src>
import jax
import jax.numpy as jnp
from jax.experimental import pallas as pl
from jax.experimental.pallas import tpu as pltpu


def _cbow_logits_kernel(mean_ref, wt_ref, out_ref):
    # mean_ref: (B, D) f32  context-mean embeddings, resident across vocab tiles
    # wt_ref:   (D, TV)     one pre-transposed vocab tile of the tied weight
    # out_ref:  (B, TV) f32 logits for this vocab tile
    w = wt_ref[...].astype(jnp.float32)   # no-op for f32; cheap VPU upcast for bf16
    out_ref[...] = jnp.dot(mean_ref[...], w, preferred_element_type=jnp.float32)


def _vmem_capacity_bytes() -> int:
    try:
        return int(pltpu.get_tpu_info().vmem_capacity_bytes)
    except Exception:
        return 64 * 1024 * 1024           # conservative (v7x-sized) fallback


def _round_down(x: int, m: int) -> int:
    return max(m, (x // m) * m)


def _round_up(x: int, m: int) -> int:
    return ((x + m - 1) // m) * m


def cbow_forward(input_ids: jax.Array, emb_weight: jax.Array) -> jax.Array:
    """input_ids: (B, C) int32; emb_weight: (V, D) f32/bf16 -> logits (B, V) f32."""
    B, C = input_ids.shape
    V, D = emb_weight.shape
    w_bytes = jnp.dtype(emb_weight.dtype).itemsize

    # ---- glue: embedding gather + context mean, hoisted out of the kernel.
    #      Mean stays f32 (matches PyTorch f32 semantics; avoids bf16 re-round).
    # TODO(synk): for training-sized B, fuse gather+mean into the kernel via
    # scalar-prefetched input_ids + pl.Element row-gather and tile the batch axis.
    ctx = jnp.take(emb_weight, input_ids, axis=0)                   # (B, C, D)
    mean_emb = jnp.mean(ctx.astype(jnp.float32), axis=1)            # (B, D) f32

    # ---- tied weight, pre-transposed once to (D, V): streamed tiles are already
    #      in (K, N) MXU layout (amortized across calls in a serving setup).
    wT = jnp.transpose(emb_weight)                                  # (D, V)

    # ---- generation-aware, byte-targeted vocab tile (multi-MiB per buffer) ----
    vmem_cap = _vmem_capacity_bytes()          # 64 MiB (v7x) / 128 MiB (v5e, v6e)
    per_buf_target = vmem_cap // 5             # ~12.8 MiB (v7x) / ~25.6 MiB (v5e/v6e)
    tv = _round_down(per_buf_target // (D * w_bytes), 128)
    tv = min(tv, _round_up(V, 128))            # never pad past a single tile

    Vp = _round_up(V, tv)
    wTp = wT if Vp == V else jnp.pad(wT, ((0, 0), (0, Vp - V)))

    # ---- explicit scoped-VMEM budget: double-buffered weight + out tiles + mean
    w_tile_bytes = tv * D * w_bytes
    out_tile_bytes = B * tv * 4
    mean_bytes = B * D * 4
    vmem_limit = min(
        vmem_cap,
        2 * w_tile_bytes + 2 * out_tile_bytes + 2 * mean_bytes + 4 * 1024 * 1024,
    )

    cost = pl.CostEstimate(
        flops=2 * B * D * Vp,
        transcendentals=0,
        bytes_accessed=Vp * D * w_bytes + B * D * 4 + B * Vp * 4,
    )

    def _build(dim_sem):
        return pl.pallas_call(
            _cbow_logits_kernel,
            out_shape=jax.ShapeDtypeStruct((B, Vp), jnp.float32),
            grid_spec=pltpu.PrefetchScalarGridSpec(
                num_scalar_prefetch=0,
                grid=(Vp // tv,),
                in_specs=[
                    # (B, D) f32 mean slab, resident across all vocab tiles
                    pl.BlockSpec((B, D), lambda j: (0, 0)),
                    # one pre-transposed vocab tile of the tied weight per step
                    pl.BlockSpec((D, tv), lambda j: (0, j)),
                ],
                out_specs=pl.BlockSpec((B, tv), lambda j: (0, j)),
            ),
            compiler_params=pltpu.CompilerParams(
                dimension_semantics=dim_sem,
                vmem_limit_bytes=vmem_limit,
            ),
            cost_estimate=cost,
        )

    # Try a real per-TensorCore split of the vocab stream (v7x: 2 TCs, ~2x on this
    # memory-bound kernel; output tiles are disjoint so it is semantically safe).
    # Fall back to plain "parallel" if the lowering rejects CORE_PARALLEL.
    dim_sem_candidates = []
    if hasattr(pltpu, "CORE_PARALLEL"):
        dim_sem_candidates.append((pltpu.CORE_PARALLEL,))
    dim_sem_candidates.append(("parallel",))

    logits = None
    last_err = None
    for ds in dim_sem_candidates:
        try:
            logits = jax.block_until_ready(_build(ds)(mean_emb, wTp))
            break
        except Exception as e:        # pragma: no cover - generation dependent
            last_err = e
            logits = None
    if logits is None:
        raise last_err

    return logits[:, :V] if Vp != V else logits


if __name__ == "__main__":
    # Small, deterministic synthetic setup (stand-in for the pretrained vectors).
    vocab_size = 1024
    emb_dim = 128
    batch = 8
    context_window = 4

    key = jax.random.PRNGKey(0)
    k_w, k_ids = jax.random.split(key)

    emb_weight = (jax.random.normal(k_w, (vocab_size, emb_dim), dtype=jnp.float32)
                  * 0.1)
    input_ids = jax.random.randint(
        k_ids, (batch, context_window), 0, vocab_size, dtype=jnp.int32)

    # ---- f32 path: exact semantics of the PyTorch module ----
    logits = jax.block_until_ready(cbow_forward(input_ids, emb_weight))
    ref = jnp.mean(jnp.take(emb_weight, input_ids, axis=0), axis=1) @ emb_weight.T
    assert logits.shape == (batch, vocab_size)
    assert jnp.allclose(logits, ref, atol=1e-3, rtol=1e-3)

    # ---- bf16 weight-streaming path (halves HBM traffic; f32 mean + f32 acc) ----
    emb_weight_bf16 = emb_weight.astype(jnp.bfloat16)
    logits_bf = jax.block_until_ready(cbow_forward(input_ids, emb_weight_bf16))
    mean_bf = jnp.mean(jnp.take(emb_weight_bf16, input_ids, axis=0)
                       .astype(jnp.float32), axis=1)
    ref_bf = mean_bf @ emb_weight_bf16.astype(jnp.float32).T
    assert logits_bf.shape == (batch, vocab_size)
    assert jnp.allclose(logits_bf, ref_bf, atol=1e-2, rtol=1e-2)

    print("KERNEL_OK")
</pallas_src>

<mosaic_0001>
module attributes {stable_mosaic.version = 11 : i64} {
  func.func @_cbow_logits_kernel(%arg0: i32, %arg1: memref<8x128xf32, #tpu.memory_space<vmem>>, %arg2: memref<128x1024xf32, #tpu.memory_space<vmem>>, %arg3: memref<8x1024xf32, #tpu.memory_space<vmem>>) attributes {dimension_semantics = [#tpu.dimension_semantics<core_parallel>], iteration_bounds = array<i64: 1>, scalar_prefetch = 0 : i64, scratch_operands = 0 : i64, tpu.core_type = #tpu.core_type<tc>, window_params = [{pipeline_mode = #tpu.pipeline_mode<synchronous>, transform_indices = @transform_0, window_bounds = array<i64: 8, 128>}, {transform_indices = @transform_1, window_bounds = array<i64: 128, 1024>}, {transform_indices = @transform_2, window_bounds = array<i64: 8, 1024>}]} {
    %c0 = arith.constant 0 : index
    %c0_0 = arith.constant 0 : index
    %0 = vector.load %arg2[%c0, %c0_0] : memref<128x1024xf32, #tpu.memory_space<vmem>>, vector<128x1024xf32>
    %c0_1 = arith.constant 0 : index
    %c0_2 = arith.constant 0 : index
    %1 = vector.load %arg1[%c0_1, %c0_2] : memref<8x128xf32, #tpu.memory_space<vmem>>, vector<8x128xf32>
    %cst = arith.constant dense<0.000000e+00> : vector<8x1024xf32>
    %2 = tpu.matmul %1, %0, %cst {dimension_numbers = #tpu.dot_dimension_numbers<[1], [0], [0], [1], [0, 0, 1, 1], [], []>} : vector<8x128xf32>, vector<128x1024xf32>, vector<8x1024xf32> -> vector<8x1024xf32>
    %c0_3 = arith.constant 0 : index
    %c0_4 = arith.constant 0 : index
    %3 = vector.load %arg3[%c0_3, %c0_4] : memref<8x1024xf32, #tpu.memory_space<vmem>>, vector<8x1024xf32>
    tpu.vector_store %arg3[%c0_3, %c0_4], %2 {strides = array<i32>} : memref<8x1024xf32, #tpu.memory_space<vmem>>, vector<8x1024xf32>,
    return
  }
  func.func @transform_0(%arg0: i32) -> (i32, i32) {
    %c0_i32 = arith.constant 0 : i32
    %c0_i32_0 = arith.constant 0 : i32
    %c0_i32_1 = arith.constant 0 : i32
    return %c0_i32, %c0_i32_0 : i32, i32
  }
  func.func @transform_1(%arg0: i32) -> (i32, i32) {
    %c0_i32 = arith.constant 0 : i32
    %c0_i32_0 = arith.constant 0 : i32
    return %c0_i32, %arg0 : i32, i32
  }
  func.func @transform_2(%arg0: i32) -> (i32, i32) {
    %c0_i32 = arith.constant 0 : i32
    %c0_i32_0 = arith.constant 0 : i32
    return %c0_i32, %arg0 : i32, i32
  }
}

module attributes {stable_mosaic.version = 11 : i64} {
  func.func @_cbow_logits_kernel(%arg0: i32, %arg1: memref<8x128xf32, #tpu.memory_space<vmem>>, %arg2: memref<128x1024xf32, #tpu.memory_space<vmem>>, %arg3: memref<8x1024xf32, #tpu.memory_space<vmem>>) attributes {dimension_semantics = [#tpu.dimension_semantics<parallel>], iteration_bounds = array<i64: 1>, scalar_prefetch = 0 : i64, scratch_operands = 0 : i64, tpu.core_type = #tpu.core_type<tc>, window_params = [{pipeline_mode = #tpu.pipeline_mode<synchronous>, transform_indices = @transform_0, window_bounds = array<i64: 8, 128>}, {transform_indices = @transform_1, window_bounds = array<i64: 128, 1024>}, {transform_indices = @transform_2, window_bounds = array<i64: 8, 1024>}]} {
    %c0 = arith.constant 0 : index
    %c0_0 = arith.constant 0 : index
    %0 = vector.load %arg2[%c0, %c0_0] : memref<128x1024xf32, #tpu.memory_space<vmem>>, vector<128x1024xf32>
    %c0_1 = arith.constant 0 : index
    %c0_2 = arith.constant 0 : index
    %1 = vector.load %arg1[%c0_1, %c0_2] : memref<8x128xf32, #tpu.memory_space<vmem>>, vector<8x128xf32>
    %cst = arith.constant dense<0.000000e+00> : vector<8x1024xf32>
    %2 = tpu.matmul %1, %0, %cst {dimension_numbers = #tpu.dot_dimension_numbers<[1], [0], [0], [1], [0, 0, 1, 1], [], []>} : vector<8x128xf32>, vector<128x1024xf32>, vector<8x1024xf32> -> vector<8x1024xf32>
    %c0_3 = arith.constant 0 : index
    %c0_4 = arith.constant 0 : index
    %3 = vector.load %arg3[%c0_3, %c0_4] : memref<8x1024xf32, #tpu.memory_space<vmem>>, vector<8x1024xf32>
    tpu.vector_store %arg3[%c0_3, %c0_4], %2 {strides = array<i32>} : memref<8x1024xf32, #tpu.memory_space<vmem>>, vector<8x1024xf32>,
    return
  }
  func.func @transform_0(%arg0: i32) -> (i32, i32) {
    %c0_i32 = arith.constant 0 : i32
    %c0_i32_0 = arith.constant 0 : i32
    %c0_i32_1 = arith.constant 0 : i32
    return %c0_i32, %c0_i32_0 : i32, i32
  }
  func.func @transform_1(%arg0: i32) -> (i32, i32) {
    %c0_i32 = arith.constant 0 : i32
    %c0_i32_0 = arith.constant 0 : i32
    return %c0_i32, %arg0 : i32, i32
  }
  func.func @transform_2(%arg0: i32) -> (i32, i32) {
    %c0_i32 = arith.constant 0 : i32
    %c0_i32_0 = arith.constant 0 : i32
    return %c0_i32, %arg0 : i32, i32
  }
}

</mosaic_0001>

<llo_original>
// kernel: tpu_custom_call.1
$region0: #{tpu_custom_call.1}
  #allocation0 [shape = 'u32[]', space=smem, size = 0x4, offset = 0x4, fixed_abs, tag = 'smem constant byte address 0x4 - core index']
  #allocation1 [shape = 'u32[72,128]{1,0:T(1,128)}', space=vmem, size = 0x9000, scoped, tag = 'internal scratch']
  %s0 = inlined_call_operand.hbm [shape: f32[8,128], index: 0, kind: input, shape index: {}]
  %s1 = inlined_call_operand.hbm [shape: f32[128,1024], index: 1, kind: input, shape index: {}]
  %s2 = inlined_call_operand.hbm [shape: f32[8,1024], index: 2, kind: output, shape index: {}]
  %s3 = sld [smem:[#allocation0]]
  $region26: #{tpu_custom_call.1} parent=0
    _
  %s5 = ssub.s32 1, %s3
  %s6 = scalar_select 0, %s5, %s3
  $region1: #{tpu_custom_call.1} parent=0
    #allocation2 [shape = 'u8[4096]{0}', space=vmem, size = 0x1000, scoped, tag = 'input window, operand 0, single buffered']
    #allocation3 [shape = 's32[1]{0}', space=sflag, size = 0x4, scoped, tag = 'scoped memory for tpu_custom_call.1']
    #allocation4 [shape = 's32[1]{0}', space=sflag, size = 0x4, scoped, tag = 'scoped memory for tpu_custom_call.1']
    #allocation5 [shape = 'u8[524288]{0}', space=vmem, size = 0x80000, scoped, tag = 'input window, operand 1, single buffered']
    #allocation6 [shape = 's32[1]{0}', space=sflag, size = 0x4, scoped, tag = 'scoped memory for tpu_custom_call.1']
    #allocation7 [shape = 'u8[32768]{0}', space=vmem, size = 0x8000, scoped, tag = 'output window, operand 0, single buffered']
    %7 = vsyncpa [#allocation3], 0
    %8 = vsyncpa [#allocation6], 0
    %9 = vsyncpa [#allocation4], 0
    // Predicated region
    $region2: #{tpu_custom_call.1} parent=1 // pred_check
      _
    $region3: #{tpu_custom_call.1} parent=1 // pred_check_branch
      %11 = sbr.rel (0) target = $region5
    $region4: #{tpu_custom_call.1} parent=1 // pred_region
      %13 = vsyncadd [#allocation3], 0
      %s15 = sshll.u32 %s0, 4
      %s16 = int_to_ptr.hbm [resolvable:$true] %s15
      %s17 = sshll.u32 [#allocation2], 4
      %s18 = int_to_ptr.vmem [resolvable:$true] %s17
      %20 = dma.hbm_to_vmem [thread:$0]  %s16, 128, %s18, [#allocation3]
    $region5: #{tpu_custom_call.1} parent=1 // pred_fallthru
      _
    // Predicated region
    $region6: #{tpu_custom_call.1} parent=1 // pred_check
      _
    $region7: #{tpu_custom_call.1} parent=1 // pred_check_branch
      %22 = sbr.rel (0) target = $region9
    $region8: #{tpu_custom_call.1} parent=1 // pred_region
      %s23 = smul.u32 8, %s6
      %25 = vsyncadd [#allocation6], 0
      %s26 = smul.addr %s23, 8
      %s27 = scalar_lea.hbm %s1, %s26
      %s28 = sshll.u32 %s27, 4
      %s29 = int_to_ptr.hbm [resolvable:$true] %s28
      %s30 = sshll.u32 [#allocation5], 4
      %s31 = int_to_ptr.vmem [resolvable:$true] %s30
      %36 = dma.hbm_to_vmem [thread:$0]  %s29, 16384, %s31, [#allocation6], 1024, 1024, 64
    $region9: #{tpu_custom_call.1} parent=1 // pred_fallthru
      _
    // Predicated region
    $region10: #{tpu_custom_call.1} parent=1 // pred_check
      _
    $region11: #{tpu_custom_call.1} parent=1 // pred_check_branch
      %38 = sbr.rel (0) target = $region13
    $region12: #{tpu_custom_call.1} parent=1 // pred_region
      %40 = dma.done [#allocation3], 128
    $region13: #{tpu_custom_call.1} parent=1 // pred_fallthru
      _
    // Predicated region
    $region14: #{tpu_custom_call.1} parent=1 // pred_check
      _
    $region15: #{tpu_custom_call.1} parent=1 // pred_check_branch
      %42 = sbr.rel (0) target = $region17
    $region16: #{tpu_custom_call.1} parent=1 // pred_region
      %44 = dma.done [#allocation6], 16384
    $region17: #{tpu_custom_call.1} parent=1 // pred_fallthru
      _
    %s45 = smul.u32 8, %s6
    %s46 = smul.u32 8, %s6
    %v47 = vld [vmem:[#allocation5] sm:$0xff]
    %v48 = vld [vmem:[#allocation5 + $0x8] sm:$0xff]
    %v49 = vld [vmem:[#allocation5 + $0x10] sm:$0xff]
    %v50 = vld [vmem:[#allocation5 + $0x18] sm:$0xff]
    %v51 = vld [vmem:[#allocation5 + $0x20] sm:$0xff]
    %v52 = vld [vmem:[#allocation5 + $0x28] sm:$0xff]
    %v53 = vld [vmem:[#allocation5 + $0x30] sm:$0xff]
    %v54 = vld [vmem:[#allocation5 + $0x38] sm:$0xff]
    %v55 = vld [vmem:[#allocation5 + $0x40] sm:$0xff]
    %v56 = vld [vmem:[#allocation5 + $0x48] sm:$0xff]
    %v57 = vld [vmem:[#allocation5 + $0x50] sm:$0xff]
    %v58 = vld [vmem:[#allocation5 + $0x58] sm:$0xff]
    %v59 = vld [vmem:[#allocation5 + $0x60] sm:$0xff]
    %v60 = vld [vmem:[#allocation5 + $0x68] sm:$0xff]
    %v61 = vld [vmem:[#allocation5 + $0x70] sm:$0xff]
    %v62 = vld [vmem:[#allocation5 + $0x78] sm:$0xff]
    %v63 = vld [vmem:[#allocation5 + $0x80] sm:$0xff]
    %v64 = vld [vmem:[#allocation5 + $0x88] sm:$0xff]
    %v65 = vld [vmem:[#allocation5 + $0x90] sm:$0xff]
    %v66 = vld [vmem:[#allocation5 + $0x98] sm:$0xff]
    %v67 = vld [vmem:[#allocation5 + $0xa0] sm:$0xff]
    %v68 = vld [vmem:[#allocation5 + $0xa8] sm:$0xff]
    %v69 = vld [vmem:[#allocation5 + $0xb0] sm:$0xff]
    %v70 = vld [vmem:[#allocation5 + $0xb8] sm:$0xff]
    %v71 = vld [vmem:[#allocation5 + $0xc0] sm:$0xff]
    %v72 = vld [vmem:[#allocation5 + $0xc8] sm:$0xff]
    %v73 = vld [vmem:[#allocation5 + $0xd0] sm:$0xff]
    %v74 = vld [vmem:[#allocation5 + $0xd8] sm:$0xff]
    %v75 = vld [vmem:[#allocation5 + $0xe0] sm:$0xff]
    %v76 = vld [vmem:[#allocation5 + $0xe8] sm:$0xff]
    %v77 = vld [vmem:[#allocation5 + $0xf0] sm:$0xff]
    %v78 = vld [vmem:[#allocation5 + $0xf8] sm:$0xff]
    %v79 = vld [vmem:[#allocation5 + $0x100] sm:$0xff]
    %v80 = vld [vmem:[#allocation5 + $0x108] sm:$0xff]
    %v81 = vld [vmem:[#allocation5 + $0x110] sm:$0xff]
    %v82 = vld [vmem:[#allocation5 + $0x118] sm:$0xff]
    %v83 = vld [vmem:[#allocation5 + $0x120] sm:$0xff]
    %v84 = vld [vmem:[#allocation5 + $0x128] sm:$0xff]
    %v85 = vld [vmem:[#allocation5 + $0x130] sm:$0xff]
    %v86 = vld [vmem:[#allocation5 + $0x138] sm:$0xff]
    %v87 = vld [vmem:[#allocation5 + $0x140] sm:$0xff]
    %v88 = vld [vmem:[#allocation5 + $0x148] sm:$0xff]
    %v89 = vld [vmem:[#allocation5 + $0x150] sm:$0xff]
    %v90 = vld [vmem:[#allocation5 + $0x158] sm:$0xff]
    %v91 = vld [vmem:[#allocation5 + $0x160] sm:$0xff]
    %v92 = vld [vmem:[#allocation5 + $0x168] sm:$0xff]
    %v93 = vld [vmem:[#allocation5 + $0x170] sm:$0xff]
    %v94 = vld [vmem:[#allocation5 + $0x178] sm:$0xff]
    %v95 = vld [vmem:[#allocation5 + $0x180] sm:$0xff]
    %v96 = vld [vmem:[#allocation5 + $0x188] sm:$0xff]
    %v97 = vld [vmem:[#allocation5 + $0x190] sm:$0xff]
    %v98 = vld [vmem:[#allocation5 + $0x198] sm:$0xff]
    %v99 = vld [vmem:[#allocation5 + $0x1a0] sm:$0xff]
    %v100 = vld [vmem:[#allocation5 + $0x1a8] sm:$0xff]
    %v101 = vld [vmem:[#allocation5 + $0x1b0] sm:$0xff]
    %v102 = vld [vmem:[#allocation5 + $0x1b8] sm:$0xff]
    %v103 = vld [vmem:[#allocation5 + $0x1c0] sm:$0xff]
    %v104 = vld [vmem:[#allocation5 + $0x1c8] sm:$0xff]
    %v105 = vld [vmem:[#allocation5 + $0x1d0] sm:$0xff]
    %v106 = vld [vmem:[#allocation5 + $0x1d8] sm:$0xff]
    %v107 = vld [vmem:[#allocation5 + $0x1e0] sm:$0xff]
    %v108 = vld [vmem:[#allocation5 + $0x1e8] sm:$0xff]
    %v109 = vld [vmem:[#allocation5 + $0x1f0] sm:$0xff]
    %v110 = vld [vmem:[#allocation5 + $0x1f8] sm:$0xff]
    %v111 = vld [vmem:[#allocation5 + $0x200] sm:$0xff]
    %v112 = vld [vmem:[#allocation5 + $0x208] sm:$0xff]
    %v113 = vld [vmem:[#allocation5 + $0x210] sm:$0xff]
    %v114 = vld [vmem:[#allocation5 + $0x218] sm:$0xff]
    %v115 = vld [vmem:[#allocation5 + $0x220] sm:$0xff]
    %v116 = vld [vmem:[#allocation5 + $0x228] sm:$0xff]
    %v117 = vld [vmem:[#allocation5 + $0x230] sm:$0xff]
    %v118 = vld [vmem:[#allocation5 + $0x238] sm:$0xff]
    %v119 = vld [vmem:[#allocation5 + $0x240] sm:$0xff]
    %v120 = vld [vmem:[#allocation5 + $0x248] sm:$0xff]
    %v121 = vld [vmem:[#allocation5 + $0x250] sm:$0xff]
    %v122 = vld [vmem:[#allocation5 + $0x258] sm:$0xff]
    %v123 = vld [vmem:[#allocation5 + $0x260] sm:$0xff]
    %v124 = vld [vmem:[#allocation5 + $0x268] sm:$0xff]
    %v125 = vld [vmem:[#allocation5 + $0x270] sm:$0xff]
    %v126 = vld [vmem:[#allocation5 + $0x278] sm:$0xff]
    %v127 = vld [vmem:[#allocation5 + $0x280] sm:$0xff]
    %v128 = vld [vmem:[#allocation5 + $0x288] sm:$0xff]
    %v129 = vld [vmem:[#allocation5 + $0x290] sm:$0xff]
    %v130 = vld [vmem:[#allocation5 + $0x298] sm:$0xff]
    %v131 = vld [vmem:[#allocation5 + $0x2a0] sm:$0xff]
    %v132 = vld [vmem:[#allocation5 + $0x2a8] sm:$0xff]
    %v133 = vld [vmem:[#allocation5 + $0x2b0] sm:$0xff]
    %v134 = vld [vmem:[#allocation5 + $0x2b8] sm:$0xff]
    %v135 = vld [vmem:[#allocation5 + $0x2c0] sm:$0xff]
    %v136 = vld [vmem:[#allocation5 + $0x2c8] sm:$0xff]
    %v137 = vld [vmem:[#allocation5 + $0x2d0] sm:$0xff]
    %v138 = vld [vmem:[#allocation5 + $0x2d8] sm:$0xff]
    %v139 = vld [vmem:[#allocation5 + $0x2e0] sm:$0xff]
    %v140 = vld [vmem:[#allocation5 + $0x2e8] sm:$0xff]
    %v141 = vld [vmem:[#allocation5 + $0x2f0] sm:$0xff]
    %v142 = vld [vmem:[#allocation5 + $0x2f8] sm:$0xff]
    %v143 = vld [vmem:[#allocation5 + $0x300] sm:$0xff]
    %v144 = vld [vmem:[#allocation5 + $0x308] sm:$0xff]
    %v145 = vld [vmem:[#allocation5 + $0x310] sm:$0xff]
    %v146 = vld [vmem:[#allocation5 + $0x318] sm:$0xff]
    %v147 = vld [vmem:[#allocation5 + $0x320] sm:$0xff]
    %v148 = vld [vmem:[#allocation5 + $0x328] sm:$0xff]
    %v149 = vld [vmem:[#allocation5 + $0x330] sm:$0xff]
    %v150 = vld [vmem:[#allocation5 + $0x338] sm:$0xff]
    %v151 = vld [vmem:[#allocation5 + $0x340] sm:$0xff]
    %v152 = vld [vmem:[#allocation5 + $0x348] sm:$0xff]
    %v153 = vld [vmem:[#allocation5 + $0x350] sm:$0xff]
    %v154 = vld [vmem:[#allocation5 + $0x358] sm:$0xff]
    %v155 = vld [vmem:[#allocation5 + $0x360] sm:$0xff]
    %v156 = vld [vmem:[#allocation5 + $0x368] sm:$0xff]
    %v157 = vld [vmem:[#allocation5 + $0x370] sm:$0xff]
    %v158 = vld [vmem:[#allocation5 + $0x378] sm:$0xff]
    %v159 = vld [vmem:[#allocation5 + $0x380] sm:$0xff]
    %v160 = vld [vmem:[#allocation5 + $0x388] sm:$0xff]
    %v161 = vld [vmem:[#allocation5 + $0x390] sm:$0xff]
    %v162 = vld [vmem:[#allocation5 + $0x398] sm:$0xff]
    %v163 = vld [vmem:[#allocation5 + $0x3a0] sm:$0xff]
    %v164 = vld [vmem:[#allocation5 + $0x3a8] sm:$0xff]
    %v165 = vld [vmem:[#allocation5 + $0x3b0] sm:$0xff]
    %v166 = vld [vmem:[#allocation5 + $0x3b8] sm:$0xff]
    %v167 = vld [vmem:[#allocation5 + $0x3c0] sm:$0xff]
    %v168 = vld [vmem:[#allocation5 + $0x3c8] sm:$0xff]
    %v169 = vld [vmem:[#allocation5 + $0x3d0] sm:$0xff]
    %v170 = vld [vmem:[#allocation5 + $0x3d8] sm:$0xff]
    %v171 = vld [vmem:[#allocation5 + $0x3e0] sm:$0xff]
    %v172 = vld [vmem:[#allocation5 + $0x3e8] sm:$0xff]
    %v173 = vld [vmem:[#allocation5 + $0x3f0] sm:$0xff]
    %v174 = vld [vmem:[#allocation5 + $0x3f8] sm:$0xff]
    %v175 = vld [vmem:[#allocation2] sm:$0xff]
    %176 = vmatpush.msra.mxu0 %v167
    %177 = vmatpush.msra.mxu0 %v159
    %178 = vmatpush.msra.mxu0 %v151
    %179 = vmatpush.msra.mxu0 %v143
    %180 = vmatpush.msra.mxu0 %v135
    %181 = vmatpush.msra.mxu0 %v127
    %182 = vmatpush.msra.mxu0 %v119
    %183 = vmatpush.msra.mxu0 %v111
    %184 = vmatpush.msra.mxu0 %v103
    %185 = vmatpush.msra.mxu0 %v95
    %186 = vmatpush.msra.mxu0 %v87
    %187 = vmatpush.msra.mxu0 %v79
    %188 = vmatpush.msra.mxu0 %v71
    %189 = vmatpush.msra.mxu0 %v63
    %190 = vmatpush.msra.mxu0 %v55
    %191 = vmatpush.msra.mxu0 %v47
    %192 = vmatmul.f32.gmra.mxu0 %v175
    %v193 = vpop.f32.mrf.mxu0
    %v194 = vadd.f32 0.0, %v193
    %195 = vdwg.mxu0
    %196 = vmatpush.msra.mxu0 %v168
    %197 = vmatpush.msra.mxu0 %v160
    %198 = vmatpush.msra.mxu0 %v152
    %199 = vmatpush.msra.mxu0 %v144
    %200 = vmatpush.msra.mxu0 %v136
    %201 = vmatpush.msra.mxu0 %v128
    %202 = vmatpush.msra.mxu0 %v120
    %203 = vmatpush.msra.mxu0 %v112
    %204 = vmatpush.msra.mxu0 %v104
    %205 = vmatpush.msra.mxu0 %v96
    %206 = vmatpush.msra.mxu0 %v88
    %207 = vmatpush.msra.mxu0 %v80
    %208 = vmatpush.msra.mxu0 %v72
    %209 = vmatpush.msra.mxu0 %v64
    %210 = vmatpush.msra.mxu0 %v56
    %211 = vmatpush.msra.mxu0 %v48
    %212 = vmatmul.f32.gmra.mxu0 %v175
    %v213 = vpop.f32.mrf.mxu0
    %v214 = vadd.f32 0.0, %v213
    %215 = vdwg.mxu0
    %216 = vmatpush.msra.mxu0 %v169
    %217 = vmatpush.msra.mxu0 %v161
    %218 = vmatpush.msra.mxu0 %v153
    %219 = vmatpush.msra.mxu0 %v145
    %220 = vmatpush.msra.mxu0 %v137
    %221 = vmatpush.msra.mxu0 %v129
    %222 = vmatpush.msra.mxu0 %v121
    %223 = vmatpush.msra.mxu0 %v113
    %224 = vmatpush.msra.mxu0 %v105
    %225 = vmatpush.msra.mxu0 %v97
    %226 = vmatpush.msra.mxu0 %v89
    %227 = vmatpush.msra.mxu0 %v81
    %228 = vmatpush.msra.mxu0 %v73
    %229 = vmatpush.msra.mxu0 %v65
    %230 = vmatpush.msra.mxu0 %v57
    %231 = vmatpush.msra.mxu0 %v49
    %232 = vmatmul.f32.gmra.mxu0 %v175
    %v233 = vpop.f32.mrf.mxu0
    %v234 = vadd.f32 0.0, %v233
    %235 = vdwg.mxu0
    %236 = vmatpush.msra.mxu0 %v170
    %237 = vmatpush.msra.mxu0 %v162
    %238 = vmatpush.msra.mxu0 %v154
    %239 = vmatpush.msra.mxu0 %v146
    %240 = vmatpush.msra.mxu0 %v138
    %241 = vmatpush.msra.mxu0 %v130
    %242 = vmatpush.msra.mxu0 %v122
    %243 = vmatpush.msra.mxu0 %v114
    %244 = vmatpush.msra.mxu0 %v106
    %245 = vmatpush.msra.mxu0 %v98
    %246 = vmatpush.msra.mxu0 %v90
    %247 = vmatpush.msra.mxu0 %v82
    %248 = vmatpush.msra.mxu0 %v74
    %249 = vmatpush.msra.mxu0 %v66
    %250 = vmatpush.msra.mxu0 %v58
    %251 = vmatpush.msra.mxu0 %v50
    %252 = vmatmul.f32.gmra.mxu0 %v175
    %v253 = vpop.f32.mrf.mxu0
    %v254 = vadd.f32 0.0, %v253
    %255 = vdwg.mxu0
    %256 = vmatpush.msra.mxu0 %v171
    %257 = vmatpush.msra.mxu0 %v163
    %258 = vmatpush.msra.mxu0 %v155
    %259 = vmatpush.msra.mxu0 %v147
    %260 = vmatpush.msra.mxu0 %v139
    %261 = vmatpush.msra.mxu0 %v131
    %262 = vmatpush.msra.mxu0 %v123
    %263 = vmatpush.msra.mxu0 %v115
    %264 = vmatpush.msra.mxu0 %v107
    %265 = vmatpush.msra.mxu0 %v99
    %266 = vmatpush.msra.mxu0 %v91
    %267 = vmatpush.msra.mxu0 %v83
    %268 = vmatpush.msra.mxu0 %v75
    %269 = vmatpush.msra.mxu0 %v67
    %270 = vmatpush.msra.mxu0 %v59
    %271 = vmatpush.msra.mxu0 %v51
    %272 = vmatmul.f32.gmra.mxu0 %v175
    %v273 = vpop.f32.mrf.mxu0
    %v274 = vadd.f32 0.0, %v273
    %275 = vdwg.mxu0
    %276 = vmatpush.msra.mxu0 %v172
    %277 = vmatpush.msra.mxu0 %v164
    %278 = vmatpush.msra.mxu0 %v156
    %279 = vmatpush.msra.mxu0 %v148
    %280 = vmatpush.msra.mxu0 %v140
    %281 = vmatpush.msra.mxu0 %v132
    %282 = vmatpush.msra.mxu0 %v124
    %283 = vmatpush.msra.mxu0 %v116
    %284 = vmatpush.msra.mxu0 %v108
    %285 = vmatpush.msra.mxu0 %v100
    %286 = vmatpush.msra.mxu0 %v92
    %287 = vmatpush.msra.mxu0 %v84
    %288 = vmatpush.msra.mxu0 %v76
    %289 = vmatpush.msra.mxu0 %v68
    %290 = vmatpush.msra.mxu0 %v60
    %291 = vmatpush.msra.mxu0 %v52
    %292 = vmatmul.f32.gmra.mxu0 %v175
    %v293 = vpop.f32.mrf.mxu0
    %v294 = vadd.f32 0.0, %v293
    %295 = vdwg.mxu0
    %296 = vmatpush.msra.mxu0 %v173
    %297 = vmatpush.msra.mxu0 %v165
    %298 = vmatpush.msra.mxu0 %v157
    %299 = vmatpush.msra.mxu0 %v149
    %300 = vmatpush.msra.mxu0 %v141
    %301 = vmatpush.msra.mxu0 %v133
    %302 = vmatpush.msra.mxu0 %v125
    %303 = vmatpush.msra.mxu0 %v117
    %304 = vmatpush.msra.mxu0 %v109
    %305 = vmatpush.msra.mxu0 %v101
    %306 = vmatpush.msra.mxu0 %v93
    %307 = vmatpush.msra.mxu0 %v85
    %308 = vmatpush.msra.mxu0 %v77
    %309 = vmatpush.msra.mxu0 %v69
    %310 = vmatpush.msra.mxu0 %v61
    %311 = vmatpush.msra.mxu0 %v53
    %312 = vmatmul.f32.gmra.mxu0 %v175
    %v313 = vpop.f32.mrf.mxu0
    %v314 = vadd.f32 0.0, %v313
    %315 = vdwg.mxu0
    %316 = vmatpush.msra.mxu0 %v174
    %317 = vmatpush.msra.mxu0 %v166
    %318 = vmatpush.msra.mxu0 %v158
    %319 = vmatpush.msra.mxu0 %v150
    %320 = vmatpush.msra.mxu0 %v142
    %321 = vmatpush.msra.mxu0 %v134
    %322 = vmatpush.msra.mxu0 %v126
    %323 = vmatpush.msra.mxu0 %v118
    %324 = vmatpush.msra.mxu0 %v110
    %325 = vmatpush.msra.mxu0 %v102
    %326 = vmatpush.msra.mxu0 %v94
    %327 = vmatpush.msra.mxu0 %v86
    %328 = vmatpush.msra.mxu0 %v78
    %329 = vmatpush.msra.mxu0 %v70
    %330 = vmatpush.msra.mxu0 %v62
    %331 = vmatpush.msra.mxu0 %v54
    %332 = vmatmul.f32.gmra.mxu0 %v175
    %v333 = vpop.f32.mrf.mxu0
    %v334 = vadd.f32 0.0, %v333
    %335 = vdwg.mxu0
    %336 = vst [vmem:[#allocation7] sm:$0xff] %v194
    %337 = vst [vmem:[#allocation7 + $0x8] sm:$0xff] %v214
    %338 = vst [vmem:[#allocation7 + $0x10] sm:$0xff] %v234
    %339 = vst [vmem:[#allocation7 + $0x18] sm:$0xff] %v254
    %340 = vst [vmem:[#allocation7 + $0x20] sm:$0xff] %v274
    %341 = vst [vmem:[#allocation7 + $0x28] sm:$0xff] %v294
    %342 = vst [vmem:[#allocation7 + $0x30] sm:$0xff] %v314
    %343 = vst [vmem:[#allocation7 + $0x38] sm:$0xff] %v334
    // Predicated region
    $region18: #{tpu_custom_call.1} parent=1 // pred_check
      _
    $region19: #{tpu_custom_call.1} parent=1 // pred_check_branch
      %345 = sbr.rel (0) target = $region21
    $region20: #{tpu_custom_call.1} parent=1 // pred_region
      %s346 = smul.u32 8, %s6
      %348 = vsyncadd [#allocation4], 0
      %s349 = smul.addr %s346, 8
      %s350 = scalar_lea.hbm %s2, %s349
      %s352 = sshll.u32 [#allocation7], 4
      %s353 = int_to_ptr.vmem [resolvable:$true] %s352
      %s354 = sshll.u32 %s350, 4
      %s355 = int_to_ptr.hbm [resolvable:$true] %s354
      %357 = dma.vmem_to_hbm [thread:$0]  %s353, 1024, %s355, [#allocation4]
    $region21: #{tpu_custom_call.1} parent=1 // pred_fallthru
      _
    // Predicated region
    $region22: #{tpu_custom_call.1} parent=1 // pred_check
      _
    $region23: #{tpu_custom_call.1} parent=1 // pred_check_branch
      %359 = sbr.rel (0) target = $region25
    $region24: #{tpu_custom_call.1} parent=1 // pred_region
      %361 = dma.done [#allocation4], 1024
    $region25: #{tpu_custom_call.1} parent=1 // pred_fallthru
      _
    %362 = vsyncpa [#allocation3], 1
    %363 = vsyncpa [#allocation6], 1
    %364 = vsyncpa [#allocation4], 1

// kernel: tpu_custom_call.1
$region0: #{tpu_custom_call.1}
  #allocation0 [shape = 'u32[]', space=smem, size = 0x4, offset = 0x4, fixed_abs, tag = 'smem constant byte address 0x4 - core index']
  #allocation1 [shape = 'u32[72,128]{1,0:T(1,128)}', space=vmem, size = 0x9000, scoped, tag = 'internal scratch']
  %s0 = inlined_call_operand.hbm [shape: f32[8,128], index: 0, kind: input, shape index: {}]
  %s1 = inlined_call_operand.hbm [shape: f32[128,1024], index: 1, kind: input, shape index: {}]
  %s2 = inlined_call_operand.hbm [shape: f32[8,1024], index: 2, kind: output, shape index: {}]
  %s3 = sld [smem:[#allocation0]]
  $region26: #{tpu_custom_call.1} parent=0
    _
  %s5 = ssub.s32 1, %s3
  %s6 = scalar_select 0, %s5, %s3
  $region1: #{tpu_custom_call.1} parent=0
    #allocation2 [shape = 'u8[4096]{0}', space=vmem, size = 0x1000, scoped, tag = 'input window, operand 0, single buffered']
    #allocation3 [shape = 's32[1]{0}', space=sflag, size = 0x4, scoped, tag = 'scoped memory for tpu_custom_call.1']
    #allocation4 [shape = 's32[1]{0}', space=sflag, size = 0x4, scoped, tag = 'scoped memory for tpu_custom_call.1']
    #allocation5 [shape = 'u8[524288]{0}', space=vmem, size = 0x80000, scoped, tag = 'input window, operand 1, single buffered']
    #allocation6 [shape = 's32[1]{0}', space=sflag, size = 0x4, scoped, tag = 'scoped memory for tpu_custom_call.1']
    #allocation7 [shape = 'u8[32768]{0}', space=vmem, size = 0x8000, scoped, tag = 'output window, operand 0, single buffered']
    %7 = vsyncpa [#allocation3], 0
    %8 = vsyncpa [#allocation6], 0
    %9 = vsyncpa [#allocation4], 0
    // Predicated region
    $region2: #{tpu_custom_call.1} parent=1 // pred_check
      _
    $region3: #{tpu_custom_call.1} parent=1 // pred_check_branch
      %11 = sbr.rel (0) target = $region5
    $region4: #{tpu_custom_call.1} parent=1 // pred_region
      %13 = vsyncadd [#allocation3], 0
      %s15 = sshll.u32 %s0, 4
      %s16 = int_to_ptr.hbm [resolvable:$true] %s15
      %s17 = sshll.u32 [#allocation2], 4
      %s18 = int_to_ptr.vmem [resolvable:$true] %s17
      %20 = dma.hbm_to_vmem [thread:$0]  %s16, 128, %s18, [#allocation3]
    $region5: #{tpu_custom_call.1} parent=1 // pred_fallthru
      _
    // Predicated region
    $region6: #{tpu_custom_call.1} parent=1 // pred_check
      _
    $region7: #{tpu_custom_call.1} parent=1 // pred_check_branch
      %22 = sbr.rel (0) target = $region9
    $region8: #{tpu_custom_call.1} parent=1 // pred_region
      %24 = vsyncadd [#allocation6], 0
      %s25 = sshll.u32 %s1, 4
      %s26 = int_to_ptr.hbm [resolvable:$true] %s25
      %s27 = sshll.u32 [#allocation5], 4
      %s28 = int_to_ptr.vmem [resolvable:$true] %s27
      %33 = dma.hbm_to_vmem [thread:$0]  %s26, 16384, %s28, [#allocation6], 1024, 1024, 64
    $region9: #{tpu_custom_call.1} parent=1 // pred_fallthru
      _
    // Predicated region
    $region10: #{tpu_custom_call.1} parent=1 // pred_check
      _
    $region11: #{tpu_custom_call.1} parent=1 // pred_check_branch
      %35 = sbr.rel (0) target = $region13
    $region12: #{tpu_custom_call.1} parent=1 // pred_region
      %37 = dma.done [#allocation3], 128
    $region13: #{tpu_custom_call.1} parent=1 // pred_fallthru
      _
    // Predicated region
    $region14: #{tpu_custom_call.1} parent=1 // pred_check
      _
    $region15: #{tpu_custom_call.1} parent=1 // pred_check_branch
      %39 = sbr.rel (0) target = $region17
    $region16: #{tpu_custom_call.1} parent=1 // pred_region
      %41 = dma.done [#allocation6], 16384
    $region17: #{tpu_custom_call.1} parent=1 // pred_fallthru
      _
    %v42 = vld [vmem:[#allocation5] sm:$0xff]
    %v43 = vld [vmem:[#allocation5 + $0x8] sm:$0xff]
    %v44 = vld [vmem:[#allocation5 + $0x10] sm:$0xff]
    %v45 = vld [vmem:[#allocation5 + $0x18] sm:$0xff]
    %v46 = vld [vmem:[#allocation5 + $0x20] sm:$0xff]
    %v47 = vld [vmem:[#allocation5 + $0x28] sm:$0xff]
    %v48 = vld [vmem:[#allocation5 + $0x30] sm:$0xff]
    %v49 = vld [vmem:[#allocation5 + $0x38] sm:$0xff]
    %v50 = vld [vmem:[#allocation5 + $0x40] sm:$0xff]
    %v51 = vld [vmem:[#allocation5 + $0x48] sm:$0xff]
    %v52 = vld [vmem:[#allocation5 + $0x50] sm:$0xff]
    %v53 = vld [vmem:[#allocation5 + $0x58] sm:$0xff]
    %v54 = vld [vmem:[#allocation5 + $0x60] sm:$0xff]
    %v55 = vld [vmem:[#allocation5 + $0x68] sm:$0xff]
    %v56 = vld [vmem:[#allocation5 + $0x70] sm:$0xff]
    %v57 = vld [vmem:[#allocation5 + $0x78] sm:$0xff]
    %v58 = vld [vmem:[#allocation5 + $0x80] sm:$0xff]
    %v59 = vld [vmem:[#allocation5 + $0x88] sm:$0xff]
    %v60 = vld [vmem:[#allocation5 + $0x90] sm:$0xff]
    %v61 = vld [vmem:[#allocation5 + $0x98] sm:$0xff]
    %v62 = vld [vmem:[#allocation5 + $0xa0] sm:$0xff]
    %v63 = vld [vmem:[#allocation5 + $0xa8] sm:$0xff]
    %v64 = vld [vmem:[#allocation5 + $0xb0] sm:$0xff]
    %v65 = vld [vmem:[#allocation5 + $0xb8] sm:$0xff]
    %v66 = vld [vmem:[#allocation5 + $0xc0] sm:$0xff]
    %v67 = vld [vmem:[#allocation5 + $0xc8] sm:$0xff]
    %v68 = vld [vmem:[#allocation5 + $0xd0] sm:$0xff]
    %v69 = vld [vmem:[#allocation5 + $0xd8] sm:$0xff]
    %v70 = vld [vmem:[#allocation5 + $0xe0] sm:$0xff]
    %v71 = vld [vmem:[#allocation5 + $0xe8] sm:$0xff]
    %v72 = vld [vmem:[#allocation5 + $0xf0] sm:$0xff]
    %v73 = vld [vmem:[#allocation5 + $0xf8] sm:$0xff]
    %v74 = vld [vmem:[#allocation5 + $0x100] sm:$0xff]
    %v75 = vld [vmem:[#allocation5 + $0x108] sm:$0xff]
    %v76 = vld [vmem:[#allocation5 + $0x110] sm:$0xff]
    %v77 = vld [vmem:[#allocation5 + $0x118] sm:$0xff]
    %v78 = vld [vmem:[#allocation5 + $0x120] sm:$0xff]
    %v79 = vld [vmem:[#allocation5 + $0x128] sm:$0xff]
    %v80 = vld [vmem:[#allocation5 + $0x130] sm:$0xff]
    %v81 = vld [vmem:[#allocation5 + $0x138] sm:$0xff]
    %v82 = vld [vmem:[#allocation5 + $0x140] sm:$0xff]
    %v83 = vld [vmem:[#allocation5 + $0x148] sm:$0xff]
    %v84 = vld [vmem:[#allocation5 + $0x150] sm:$0xff]
    %v85 = vld [vmem:[#allocation5 + $0x158] sm:$0xff]
    %v86 = vld [vmem:[#allocation5 + $0x160] sm:$0xff]
    %v87 = vld [vmem:[#allocation5 + $0x168] sm:$0xff]
    %v88 = vld [vmem:[#allocation5 + $0x170] sm:$0xff]
    %v89 = vld [vmem:[#allocation5 + $0x178] sm:$0xff]
    %v90 = vld [vmem:[#allocation5 + $0x180] sm:$0xff]
    %v91 = vld [vmem:[#allocation5 + $0x188] sm:$0xff]
    %v92 = vld [vmem:[#allocation5 + $0x190] sm:$0xff]
    %v93 = vld [vmem:[#allocation5 + $0x198] sm:$0xff]
    %v94 = vld [vmem:[#allocation5 + $0x1a0] sm:$0xff]
    %v95 = vld [vmem:[#allocation5 + $0x1a8] sm:$0xff]
    %v96 = vld [vmem:[#allocation5 + $0x1b0] sm:$0xff]
    %v97 = vld [vmem:[#allocation5 + $0x1b8] sm:$0xff]
    %v98 = vld [vmem:[#allocation5 + $0x1c0] sm:$0xff]
    %v99 = vld [vmem:[#allocation5 + $0x1c8] sm:$0xff]
    %v100 = vld [vmem:[#allocation5 + $0x1d0] sm:$0xff]
    %v101 = vld [vmem:[#allocation5 + $0x1d8] sm:$0xff]
    %v102 = vld [vmem:[#allocation5 + $0x1e0] sm:$0xff]
    %v103 = vld [vmem:[#allocation5 + $0x1e8] sm:$0xff]
    %v104 = vld [vmem:[#allocation5 + $0x1f0] sm:$0xff]
    %v105 = vld [vmem:[#allocation5 + $0x1f8] sm:$0xff]
    %v106 = vld [vmem:[#allocation5 + $0x200] sm:$0xff]
    %v107 = vld [vmem:[#allocation5 + $0x208] sm:$0xff]
    %v108 = vld [vmem:[#allocation5 + $0x210] sm:$0xff]
    %v109 = vld [vmem:[#allocation5 + $0x218] sm:$0xff]
    %v110 = vld [vmem:[#allocation5 + $0x220] sm:$0xff]
    %v111 = vld [vmem:[#allocation5 + $0x228] sm:$0xff]
    %v112 = vld [vmem:[#allocation5 + $0x230] sm:$0xff]
    %v113 = vld [vmem:[#allocation5 + $0x238] sm:$0xff]
    %v114 = vld [vmem:[#allocation5 + $0x240] sm:$0xff]
    %v115 = vld [vmem:[#allocation5 + $0x248] sm:$0xff]
    %v116 = vld [vmem:[#allocation5 + $0x250] sm:$0xff]
    %v117 = vld [vmem:[#allocation5 + $0x258] sm:$0xff]
    %v118 = vld [vmem:[#allocation5 + $0x260] sm:$0xff]
    %v119 = vld [vmem:[#allocation5 + $0x268] sm:$0xff]
    %v120 = vld [vmem:[#allocation5 + $0x270] sm:$0xff]
    %v121 = vld [vmem:[#allocation5 + $0x278] sm:$0xff]
    %v122 = vld [vmem:[#allocation5 + $0x280] sm:$0xff]
    %v123 = vld [vmem:[#allocation5 + $0x288] sm:$0xff]
    %v124 = vld [vmem:[#allocation5 + $0x290] sm:$0xff]
    %v125 = vld [vmem:[#allocation5 + $0x298] sm:$0xff]
    %v126 = vld [vmem:[#allocation5 + $0x2a0] sm:$0xff]
    %v127 = vld [vmem:[#allocation5 + $0x2a8] sm:$0xff]
    %v128 = vld [vmem:[#allocation5 + $0x2b0] sm:$0xff]
    %v129 = vld [vmem:[#allocation5 + $0x2b8] sm:$0xff]
    %v130 = vld [vmem:[#allocation5 + $0x2c0] sm:$0xff]
    %v131 = vld [vmem:[#allocation5 + $0x2c8] sm:$0xff]
    %v132 = vld [vmem:[#allocation5 + $0x2d0] sm:$0xff]
    %v133 = vld [vmem:[#allocation5 + $0x2d8] sm:$0xff]
    %v134 = vld [vmem:[#allocation5 + $0x2e0] sm:$0xff]
    %v135 = vld [vmem:[#allocation5 + $0x2e8] sm:$0xff]
    %v136 = vld [vmem:[#allocation5 + $0x2f0] sm:$0xff]
    %v137 = vld [vmem:[#allocation5 + $0x2f8] sm:$0xff]
    %v138 = vld [vmem:[#allocation5 + $0x300] sm:$0xff]
    %v139 = vld [vmem:[#allocation5 + $0x308] sm:$0xff]
    %v140 = vld [vmem:[#allocation5 + $0x310] sm:$0xff]
    %v141 = vld [vmem:[#allocation5 + $0x318] sm:$0xff]
    %v142 = vld [vmem:[#allocation5 + $0x320] sm:$0xff]
    %v143 = vld [vmem:[#allocation5 + $0x328] sm:$0xff]
    %v144 = vld [vmem:[#allocation5 + $0x330] sm:$0xff]
    %v145 = vld [vmem:[#allocation5 + $0x338] sm:$0xff]
    %v146 = vld [vmem:[#allocation5 + $0x340] sm:$0xff]
    %v147 = vld [vmem:[#allocation5 + $0x348] sm:$0xff]
    %v148 = vld [vmem:[#allocation5 + $0x350] sm:$0xff]
    %v149 = vld [vmem:[#allocation5 + $0x358] sm:$0xff]
    %v150 = vld [vmem:[#allocation5 + $0x360] sm:$0xff]
    %v151 = vld [vmem:[#allocation5 + $0x368] sm:$0xff]
    %v152 = vld [vmem:[#allocation5 + $0x370] sm:$0xff]
    %v153 = vld [vmem:[#allocation5 + $0x378] sm:$0xff]
    %v154 = vld [vmem:[#allocation5 + $0x380] sm:$0xff]
    %v155 = vld [vmem:[#allocation5 + $0x388] sm:$0xff]
    %v156 = vld [vmem:[#allocation5 + $0x390] sm:$0xff]
    %v157 = vld [vmem:[#allocation5 + $0x398] sm:$0xff]
    %v158 = vld [vmem:[#allocation5 + $0x3a0] sm:$0xff]
    %v159 = vld [vmem:[#allocation5 + $0x3a8] sm:$0xff]
    %v160 = vld [vmem:[#allocation5 + $0x3b0] sm:$0xff]
    %v161 = vld [vmem:[#allocation5 + $0x3b8] sm:$0xff]
    %v162 = vld [vmem:[#allocation5 + $0x3c0] sm:$0xff]
    %v163 = vld [vmem:[#allocation5 + $0x3c8] sm:$0xff]
    %v164 = vld [vmem:[#allocation5 + $0x3d0] sm:$0xff]
    %v165 = vld [vmem:[#allocation5 + $0x3d8] sm:$0xff]
    %v166 = vld [vmem:[#allocation5 + $0x3e0] sm:$0xff]
    %v167 = vld [vmem:[#allocation5 + $0x3e8] sm:$0xff]
    %v168 = vld [vmem:[#allocation5 + $0x3f0] sm:$0xff]
    %v169 = vld [vmem:[#allocation5 + $0x3f8] sm:$0xff]
    %v170 = vld [vmem:[#allocation2] sm:$0xff]
    %171 = vmatpush.msra.mxu0 %v162
    %172 = vmatpush.msra.mxu0 %v154
    %173 = vmatpush.msra.mxu0 %v146
    %174 = vmatpush.msra.mxu0 %v138
    %175 = vmatpush.msra.mxu0 %v130
    %176 = vmatpush.msra.mxu0 %v122
    %177 = vmatpush.msra.mxu0 %v114
    %178 = vmatpush.msra.mxu0 %v106
    %179 = vmatpush.msra.mxu0 %v98
    %180 = vmatpush.msra.mxu0 %v90
    %181 = vmatpush.msra.mxu0 %v82
    %182 = vmatpush.msra.mxu0 %v74
    %183 = vmatpush.msra.mxu0 %v66
    %184 = vmatpush.msra.mxu0 %v58
    %185 = vmatpush.msra.mxu0 %v50
    %186 = vmatpush.msra.mxu0 %v42
    %187 = vmatmul.f32.gmra.mxu0 %v170
    %v188 = vpop.f32.mrf.mxu0
    %v189 = vadd.f32 0.0, %v188
    %190 = vdwg.mxu0
    %191 = vmatpush.msra.mxu0 %v163
    %192 = vmatpush.msra.mxu0 %v155
    %193 = vmatpush.msra.mxu0 %v147
    %194 = vmatpush.msra.mxu0 %v139
    %195 = vmatpush.msra.mxu0 %v131
    %196 = vmatpush.msra.mxu0 %v123
    %197 = vmatpush.msra.mxu0 %v115
    %198 = vmatpush.msra.mxu0 %v107
    %199 = vmatpush.msra.mxu0 %v99
    %200 = vmatpush.msra.mxu0 %v91
    %201 = vmatpush.msra.mxu0 %v83
    %202 = vmatpush.msra.mxu0 %v75
    %203 = vmatpush.msra.mxu0 %v67
    %204 = vmatpush.msra.mxu0 %v59
    %205 = vmatpush.msra.mxu0 %v51
    %206 = vmatpush.msra.mxu0 %v43
    %207 = vmatmul.f32.gmra.mxu0 %v170
    %v208 = vpop.f32.mrf.mxu0
    %v209 = vadd.f32 0.0, %v208
    %210 = vdwg.mxu0
    %211 = vmatpush.msra.mxu0 %v164
    %212 = vmatpush.msra.mxu0 %v156
    %213 = vmatpush.msra.mxu0 %v148
    %214 = vmatpush.msra.mxu0 %v140
    %215 = vmatpush.msra.mxu0 %v132
    %216 = vmatpush.msra.mxu0 %v124
    %217 = vmatpush.msra.mxu0 %v116
    %218 = vmatpush.msra.mxu0 %v108
    %219 = vmatpush.msra.mxu0 %v100
    %220 = vmatpush.msra.mxu0 %v92
    %221 = vmatpush.msra.mxu0 %v84
    %222 = vmatpush.msra.mxu0 %v76
    %223 = vmatpush.msra.mxu0 %v68
    %224 = vmatpush.msra.mxu0 %v60
    %225 = vmatpush.msra.mxu0 %v52
    %226 = vmatpush.msra.mxu0 %v44
    %227 = vmatmul.f32.gmra.mxu0 %v170
    %v228 = vpop.f32.mrf.mxu0
    %v229 = vadd.f32 0.0, %v228
    %230 = vdwg.mxu0
    %231 = vmatpush.msra.mxu0 %v165
    %232 = vmatpush.msra.mxu0 %v157
    %233 = vmatpush.msra.mxu0 %v149
    %234 = vmatpush.msra.mxu0 %v141
    %235 = vmatpush.msra.mxu0 %v133
    %236 = vmatpush.msra.mxu0 %v125
    %237 = vmatpush.msra.mxu0 %v117
    %238 = vmatpush.msra.mxu0 %v109
    %239 = vmatpush.msra.mxu0 %v101
    %240 = vmatpush.msra.mxu0 %v93
    %241 = vmatpush.msra.mxu0 %v85
    %242 = vmatpush.msra.mxu0 %v77
    %243 = vmatpush.msra.mxu0 %v69
    %244 = vmatpush.msra.mxu0 %v61
    %245 = vmatpush.msra.mxu0 %v53
    %246 = vmatpush.msra.mxu0 %v45
    %247 = vmatmul.f32.gmra.mxu0 %v170
    %v248 = vpop.f32.mrf.mxu0
    %v249 = vadd.f32 0.0, %v248
    %250 = vdwg.mxu0
    %251 = vmatpush.msra.mxu0 %v166
    %252 = vmatpush.msra.mxu0 %v158
    %253 = vmatpush.msra.mxu0 %v150
    %254 = vmatpush.msra.mxu0 %v142
    %255 = vmatpush.msra.mxu0 %v134
    %256 = vmatpush.msra.mxu0 %v126
    %257 = vmatpush.msra.mxu0 %v118
    %258 = vmatpush.msra.mxu0 %v110
    %259 = vmatpush.msra.mxu0 %v102
    %260 = vmatpush.msra.mxu0 %v94
    %261 = vmatpush.msra.mxu0 %v86
    %262 = vmatpush.msra.mxu0 %v78
    %263 = vmatpush.msra.mxu0 %v70
    %264 = vmatpush.msra.mxu0 %v62
    %265 = vmatpush.msra.mxu0 %v54
    %266 = vmatpush.msra.mxu0 %v46
    %267 = vmatmul.f32.gmra.mxu0 %v170
    %v268 = vpop.f32.mrf.mxu0
    %v269 = vadd.f32 0.0, %v268
    %270 = vdwg.mxu0
    %271 = vmatpush.msra.mxu0 %v167
    %272 = vmatpush.msra.mxu0 %v159
    %273 = vmatpush.msra.mxu0 %v151
    %274 = vmatpush.msra.mxu0 %v143
    %275 = vmatpush.msra.mxu0 %v135
    %276 = vmatpush.msra.mxu0 %v127
    %277 = vmatpush.msra.mxu0 %v119
    %278 = vmatpush.msra.mxu0 %v111
    %279 = vmatpush.msra.mxu0 %v103
    %280 = vmatpush.msra.mxu0 %v95
    %281 = vmatpush.msra.mxu0 %v87
    %282 = vmatpush.msra.mxu0 %v79
    %283 = vmatpush.msra.mxu0 %v71
    %284 = vmatpush.msra.mxu0 %v63
    %285 = vmatpush.msra.mxu0 %v55
    %286 = vmatpush.msra.mxu0 %v47
    %287 = vmatmul.f32.gmra.mxu0 %v170
    %v288 = vpop.f32.mrf.mxu0
    %v289 = vadd.f32 0.0, %v288
    %290 = vdwg.mxu0
    %291 = vmatpush.msra.mxu0 %v168
    %292 = vmatpush.msra.mxu0 %v160
    %293 = vmatpush.msra.mxu0 %v152
    %294 = vmatpush.msra.mxu0 %v144
    %295 = vmatpush.msra.mxu0 %v136
    %296 = vmatpush.msra.mxu0 %v128
    %297 = vmatpush.msra.mxu0 %v120
    %298 = vmatpush.msra.mxu0 %v112
    %299 = vmatpush.msra.mxu0 %v104
    %300 = vmatpush.msra.mxu0 %v96
    %301 = vmatpush.msra.mxu0 %v88
    %302 = vmatpush.msra.mxu0 %v80
    %303 = vmatpush.msra.mxu0 %v72
    %304 = vmatpush.msra.mxu0 %v64
    %305 = vmatpush.msra.mxu0 %v56
    %306 = vmatpush.msra.mxu0 %v48
    %307 = vmatmul.f32.gmra.mxu0 %v170
    %v308 = vpop.f32.mrf.mxu0
    %v309 = vadd.f32 0.0, %v308
    %310 = vdwg.mxu0
    %311 = vmatpush.msra.mxu0 %v169
    %312 = vmatpush.msra.mxu0 %v161
    %313 = vmatpush.msra.mxu0 %v153
    %314 = vmatpush.msra.mxu0 %v145
    %315 = vmatpush.msra.mxu0 %v137
    %316 = vmatpush.msra.mxu0 %v129
    %317 = vmatpush.msra.mxu0 %v121
    %318 = vmatpush.msra.mxu0 %v113
    %319 = vmatpush.msra.mxu0 %v105
    %320 = vmatpush.msra.mxu0 %v97
    %321 = vmatpush.msra.mxu0 %v89
    %322 = vmatpush.msra.mxu0 %v81
    %323 = vmatpush.msra.mxu0 %v73
    %324 = vmatpush.msra.mxu0 %v65
    %325 = vmatpush.msra.mxu0 %v57
    %326 = vmatpush.msra.mxu0 %v49
    %327 = vmatmul.f32.gmra.mxu0 %v170
    %v328 = vpop.f32.mrf.mxu0
    %v329 = vadd.f32 0.0, %v328
    %330 = vdwg.mxu0
    %331 = vst [vmem:[#allocation7] sm:$0xff] %v189
    %332 = vst [vmem:[#allocation7 + $0x8] sm:$0xff] %v209
    %333 = vst [vmem:[#allocation7 + $0x10] sm:$0xff] %v229
    %334 = vst [vmem:[#allocation7 + $0x18] sm:$0xff] %v249
    %335 = vst [vmem:[#allocation7 + $0x20] sm:$0xff] %v269
    %336 = vst [vmem:[#allocation7 + $0x28] sm:$0xff] %v289
    %337 = vst [vmem:[#allocation7 + $0x30] sm:$0xff] %v309
    %338 = vst [vmem:[#allocation7 + $0x38] sm:$0xff] %v329
    // Predicated region
    $region18: #{tpu_custom_call.1} parent=1 // pred_check
      _
    $region19: #{tpu_custom_call.1} parent=1 // pred_check_branch
      %340 = sbr.rel (0) target = $region21
    $region20: #{tpu_custom_call.1} parent=1 // pred_region
      %342 = vsyncadd [#allocation4], 0
      %s344 = sshll.u32 [#allocation7], 4
      %s345 = int_to_ptr.vmem [resolvable:$true] %s344
      %s346 = sshll.u32 %s2, 4
      %s347 = int_to_ptr.hbm [resolvable:$true] %s346
      %349 = dma.vmem_to_hbm [thread:$0]  %s345, 1024, %s347, [#allocation4]
    $region21: #{tpu_custom_call.1} parent=1 // pred_fallthru
      _
    // Predicated region
    $region22: #{tpu_custom_call.1} parent=1 // pred_check
      _
    $region23: #{tpu_custom_call.1} parent=1 // pred_check_branch
      %351 = sbr.rel (0) target = $region25
    $region24: #{tpu_custom_call.1} parent=1 // pred_region
      %353 = dma.done [#allocation4], 1024
    $region25: #{tpu_custom_call.1} parent=1 // pred_fallthru
      _
    %354 = vsyncpa [#allocation3], 1
    %355 = vsyncpa [#allocation6], 1
    %356 = vsyncpa [#allocation4], 1

</llo_original>
